<compile_context>
chip_gen: v7x
topology: tpu7x:2x2x1
jax: 0.10.0
libtpu: 0.0.40
codegen_flags: <defaults>
</compile_context>

<pallas_src>
import jax
import jax.numpy as jnp
from jax.experimental import pallas as pl
from jax.experimental.pallas import tpu as pltpu


def _round_up(n, m):
    return ((n + m - 1) // m) * m


def _pe_kernel(x_ref, p_ref, o_ref):
    # x_ref: (tB, 2), p_ref: (2, Fp), o_ref: (tB, 2*Fp)   [all f32, Fp % 128 == 0]
    Fp = p_ref.shape[1]
    # K=2 contraction as a VPU broadcast-FMA (keeps the MXU/XLU slots free).
    x0 = x_ref[:, 0:1]          # (tB, 1)
    x1 = x_ref[:, 1:2]          # (tB, 1)
    p0 = p_ref[0:1, :]          # (1, Fp)
    p1 = p_ref[1:2, :]          # (1, Fp)
    x_ = x0 * p0 + x1 * p1      # (tB, Fp) f32
    s = jnp.sin(x_)             # transcendental computed once, stored twice
    # cat([sin(x_), sin(x_)], dim=1): two lane-aligned, full-width stores.
    o_ref[:, :Fp] = s
    o_ref[:, Fp:] = s


def pe_forward(x, P, *, tile_b=512):
    """x: (B, 2) float32, P: (2, F) float32 -> (B, 2*F) float32."""
    B, two = x.shape
    assert two == 2 and P.shape[0] == 2
    F = P.shape[1]

    x = x.astype(jnp.float32)
    P = P.astype(jnp.float32)

    # Lane-align each half of the concatenated output: pad F up to 128.
    Fp = _round_up(F, 128)
    if Fp != F:
        P = jnp.pad(P, ((0, 0), (0, Fp - F)))  # sin(0)=0 in padded cols; sliced off

    # Batch tile: multiple of 8 (sublanes); cap so the double-buffered output
    # slab stays <= ~16 MiB, comfortably inside every chip's scoped-VMEM
    # default while still amortizing per-grid-step overhead.
    max_out_bytes = 16 * 1024 * 1024
    tb_cap = max(8, (max_out_bytes // (2 * 2 * Fp * 4)) // 8 * 8)
    tB = min(max(8, _round_up(min(tile_b, B), 8)), tb_cap)

    # Pad B so every grid block is full -> unmasked stores, no partial tiles.
    Bp = _round_up(B, tB)
    if Bp != B:
        x = jnp.pad(x, ((0, Bp - B), (0, 0)))

    out_shape = jax.ShapeDtypeStruct((Bp, 2 * Fp), jnp.float32)

    # VMEM budget: double-buffered x + out tiles, resident P, plus headroom.
    vmem_need = 2 * (tB * 2 * 4 + tB * 2 * Fp * 4) + 2 * Fp * 4 + (2 << 20)
    vmem_limit = int(min(max(vmem_need, 8 << 20), 32 << 20))

    out = pl.pallas_call(
        _pe_kernel,
        out_shape=out_shape,
        grid_spec=pl.GridSpec(
            grid=(Bp // tB,),
            in_specs=[
                pl.BlockSpec((tB, 2), lambda i: (i, 0)),    # streamed x tile
                pl.BlockSpec((2, Fp), lambda i: (0, 0)),    # resident P
            ],
            out_specs=pl.BlockSpec((tB, 2 * Fp), lambda i: (i, 0)),
        ),
        compiler_params=pltpu.CompilerParams(
            dimension_semantics=("parallel",),   # shards across TCs on v7x
            vmem_limit_bytes=vmem_limit,
        ),
    )(x, P)

    # Undo padding: keep the first F columns of each concatenated half and
    # the first B rows.  (No-op slice/concat when F % 128 == 0 and B % tB == 0.)
    if Fp != F or Bp != B:
        out = jnp.concatenate([out[:B, :F], out[:B, Fp:Fp + F]], axis=1)
    return out


if __name__ == "__main__":
    key = jax.random.PRNGKey(0)
    kx, kp = jax.random.split(key)

    B, F = 8, 64  # small demo shapes; output is (B, 2*F) = (8, 128)

    x = jax.random.normal(kx, (B, 2), dtype=jnp.float32)
    # Deterministic "Gaussian Fourier feature" style encoding matrix (2, F).
    P = jax.random.normal(kp, (2, F), dtype=jnp.float32) * 10.0

    out = pe_forward(x, P)
    out = jax.block_until_ready(out)

    # Reference check in plain JAX (mirrors the PyTorch forward exactly).
    x_ = x @ P
    ref = jnp.concatenate([jnp.sin(x_), jnp.sin(x_)], axis=1)
    assert out.shape == (B, 2 * F)
    assert jnp.allclose(out, ref, atol=1e-5), "mismatch vs reference"

    print("KERNEL_OK")
</pallas_src>

<mosaic_0001>
module attributes {stable_mosaic.version = 11 : i64} {
  func.func @_pe_kernel(%arg0: i32, %arg1: memref<8x2xf32, #tpu.memory_space<vmem>>, %arg2: memref<2x128xf32, #tpu.memory_space<vmem>>, %arg3: memref<8x256xf32, #tpu.memory_space<vmem>>) attributes {dimension_semantics = [#tpu.dimension_semantics<parallel>], iteration_bounds = array<i64: 1>, scalar_prefetch = 0 : i64, scratch_operands = 0 : i64, tpu.core_type = #tpu.core_type<tc>, window_params = [{transform_indices = @transform_0, window_bounds = array<i64: 8, 2>}, {pipeline_mode = #tpu.pipeline_mode<synchronous>, transform_indices = @transform_1, window_bounds = array<i64: 2, 128>}, {transform_indices = @transform_2, window_bounds = array<i64: 8, 256>}]} {
    %c0 = arith.constant 0 : index
    %c0_0 = arith.constant 0 : index
    %0 = vector.load %arg1[%c0, %c0_0] : memref<8x2xf32, #tpu.memory_space<vmem>>, vector<8x1xf32>
    %c0_1 = arith.constant 0 : index
    %c1 = arith.constant 1 : index
    %1 = vector.load %arg1[%c0_1, %c1] : memref<8x2xf32, #tpu.memory_space<vmem>>, vector<8x1xf32>
    %c0_2 = arith.constant 0 : index
    %c0_3 = arith.constant 0 : index
    %2 = vector.load %arg2[%c0_2, %c0_3] : memref<2x128xf32, #tpu.memory_space<vmem>>, vector<1x128xf32>
    %c1_4 = arith.constant 1 : index
    %c0_5 = arith.constant 0 : index
    %3 = vector.load %arg2[%c1_4, %c0_5] : memref<2x128xf32, #tpu.memory_space<vmem>>, vector<1x128xf32>
    %4 = vector.broadcast %0 : vector<8x1xf32> to vector<8x128xf32>
    %5 = vector.broadcast %2 : vector<1x128xf32> to vector<8x128xf32>
    %6 = arith.mulf %4, %5 : vector<8x128xf32>
    %7 = vector.broadcast %1 : vector<8x1xf32> to vector<8x128xf32>
    %8 = vector.broadcast %3 : vector<1x128xf32> to vector<8x128xf32>
    %9 = arith.mulf %7, %8 : vector<8x128xf32>
    %10 = arith.addf %6, %9 : vector<8x128xf32>
    %11 = math.sin %10 : vector<8x128xf32>
    %c0_6 = arith.constant 0 : index
    %c0_7 = arith.constant 0 : index
    %12 = vector.load %arg3[%c0_6, %c0_7] : memref<8x256xf32, #tpu.memory_space<vmem>>, vector<8x128xf32>
    tpu.vector_store %arg3[%c0_6, %c0_7], %11 {strides = array<i32>} : memref<8x256xf32, #tpu.memory_space<vmem>>, vector<8x128xf32>,
    %c0_8 = arith.constant 0 : index
    %c128 = arith.constant 128 : index
    %13 = vector.load %arg3[%c0_8, %c128] : memref<8x256xf32, #tpu.memory_space<vmem>>, vector<8x128xf32>
    tpu.vector_store %arg3[%c0_8, %c128], %11 {strides = array<i32>} : memref<8x256xf32, #tpu.memory_space<vmem>>, vector<8x128xf32>,
    return
  }
  func.func @transform_0(%arg0: i32) -> (i32, i32) {
    %c0_i32 = arith.constant 0 : i32
    %c0_i32_0 = arith.constant 0 : i32
    return %arg0, %c0_i32 : i32, i32
  }
  func.func @transform_1(%arg0: i32) -> (i32, i32) {
    %c0_i32 = arith.constant 0 : i32
    %c0_i32_0 = arith.constant 0 : i32
    %c0_i32_1 = arith.constant 0 : i32
    return %c0_i32, %c0_i32_0 : i32, i32
  }
  func.func @transform_2(%arg0: i32) -> (i32, i32) {
    %c0_i32 = arith.constant 0 : i32
    %c0_i32_0 = arith.constant 0 : i32
    return %arg0, %c0_i32 : i32, i32
  }
}

</mosaic_0001>

<llo_original>
// kernel: tpu_custom_call.1
$region0: #{tpu_custom_call.1}
  #allocation0 [shape = 'u32[]', space=smem, size = 0x4, offset = 0x4, fixed_abs, tag = 'smem constant byte address 0x4 - core index']
  #allocation1 [shape = 'u32[144,128]{1,0:T(1,128)}', space=vmem, size = 0x12000, scoped, tag = 'internal scratch']
  %s0 = inlined_call_operand.vmem [shape: f32[8,2], index: 0, kind: input, shape index: {}]
  %s1 = inlined_call_operand.vmem [shape: f32[2,128], index: 1, kind: input, shape index: {}]
  %s2 = inlined_call_operand.hbm [shape: f32[8,256], index: 2, kind: output, shape index: {}]
  %s3 = sld [smem:[#allocation0]]
  $region18: #{tpu_custom_call.1} parent=0
    _
  %s5 = ssub.s32 1, %s3
  %s6 = scalar_select 0, %s5, %s3
  $region1: #{tpu_custom_call.1} parent=0
    #allocation2 [shape = 'u8[8192]{0}', space=vmem, size = 0x2000, scoped, tag = 'output window, operand 0, single buffered']
    #allocation3 [shape = 's32[1]{0}', space=sflag, size = 0x4, scoped, tag = 'scoped memory for tpu_custom_call.1']
    %7 = vsyncpa [#allocation3], 0
    // Predicated region
    $region2: #{tpu_custom_call.1} parent=1 // pred_check
      _
    $region3: #{tpu_custom_call.1} parent=1 // pred_check_branch
      %9 = sbr.rel (0) target = $region5
    $region4: #{tpu_custom_call.1} parent=1 // pred_region
      _
    $region5: #{tpu_custom_call.1} parent=1 // pred_fallthru
      _
    // Predicated region
    $region6: #{tpu_custom_call.1} parent=1 // pred_check
      _
    $region7: #{tpu_custom_call.1} parent=1 // pred_check_branch
      %11 = sbr.rel (0) target = $region9
    $region8: #{tpu_custom_call.1} parent=1 // pred_region
      _
    $region9: #{tpu_custom_call.1} parent=1 // pred_fallthru
      _
    %v12 = vld [vmem:[%s0] sm:$0xff]
    %v13 = vld [vmem:[%s1] sm:$0x1]
    %v14 = vld [vmem:[%s1 + $0x1] sm:$0x1]
    %16 = vset.pattern.permute.xlu0 0
    %17 = vperm.xlu0 %16, %v12
    %v18 = vpop.permute.xlu0 %17
    %v20 = vlaneseq
    %v21 = vshrl.u32 %v20, 7
    %v22 = vsub.s32 0, %v21
    %v23 = vrot.slane %v13, %v22
    %v24 = vmul.f32 %v18, %v23
    %25 = vset.pattern.permute.xlu0 1
    %26 = vperm.xlu0 %25, %v12
    %v27 = vpop.permute.xlu0 %26
    %v29 = vlaneseq
    %v30 = vshrl.u32 %v29, 7
    %v31 = vsub.s32 0, %v30
    %v32 = vrot.slane %v14, %v31
    %v33 = vmul.f32 %v27, %v32
    %v34 = vadd.f32 %v24, %v33
    %v35 = vand.u32 2147483647, %v34
    %vm36 = vcmp.le.f32.partialorder %v35, 0.7853982
    %vm37 = vcmp.lt.s32.totalorder %v34, 0
    %v38 = vand.u32 %v34, 2139095040
    %v39 = vshrl.u32 %v38, 23
    %v40 = vsub.s32 %v39, 127
    %v41 = vand.u32 2147483647, %v34
    %v42 = vand.u32 %v41, 8388607
    %v43 = vor.u32 %v42, 8388608
    %v44 = vsub.s32 0, %v43
    %v45 = vadd.s32 %v40, 1
    %vm46 = vcmp.gt.s32.totalorder %v45, 0
    %v47 = vsel %vm46, %v45, 0
    %v48 = vshrl.u32 %v47, 5
    %v49 = vand.u32 %v47, 31
    %v50 = vsub.s32 32, %v49
    %v51 = vshrl.u32 683565275, %v50
    %v52 = vshll.u32 683565275, %v49
    %v53 = vshrl.u32 2475754826, %v50
    %v54 = vor.u32 %v52, %v53
    %v55 = vshll.u32 2475754826, %v49
    %v56 = vshrl.u32 2131351028, %v50
    %v57 = vor.u32 %v55, %v56
    %v58 = vshll.u32 2131351028, %v49
    %v59 = vshrl.u32 2102212464, %v50
    %v60 = vor.u32 %v58, %v59
    %v61 = vshll.u32 2102212464, %v49
    %v62 = vshrl.u32 920167782, %v50
    %v63 = vor.u32 %v61, %v62
    %v64 = vshll.u32 920167782, %v49
    %v65 = vshrl.u32 1326507024, %v50
    %v66 = vor.u32 %v64, %v65
    %vm67 = vcmp.lt.s32.totalorder %v48, 1
    %vm68 = vcmp.lt.s32.totalorder %v48, 2
    %vm69 = vcmp.lt.s32.totalorder %v48, 3
    %vm70 = vcmp.lt.s32.totalorder %v48, 4
    %v71 = vsel %vm67, %v51, %v54
    %v72 = vsel %vm70, %v60, 2102212464
    %v73 = vsel %vm69, %v57, %v72
    %v74 = vsel %vm68, %v71, %v73
    %v75 = vsel %vm67, %v54, %v57
    %v76 = vsel %vm70, %v63, 920167782
    %v77 = vsel %vm69, %v60, %v76
    %v78 = vsel %vm68, %v75, %v77
    %v79 = vsel %vm67, %v57, %v60
    %v80 = vsel %vm70, %v66, 1326507024
    %v81 = vsel %vm69, %v63, %v80
    %v82 = vsel %vm68, %v79, %v81
    %v83 = vshll.u32 %v43, 8
    %v84 = vmul.u32.u64.compose %v83, %v82
    %v85 = vextract.low.u32 %v84
    %v86 = vextract.high.u32 %v84
    %v87 = vmul.u32.u64.compose %v83, %v78
    %v88 = vextract.low.u32 %v87
    %v89 = vextract.high.u32 %v87
    %v90 = vmul.u32 %v83, %v74
    %v91 = vadd.s32 %v86, %v88
    %vm92 = vc.u32 %v86, %v88
    %v93 = vadd.s32 %v89, 1
    %v94 = vsel %vm92, %v93, %v89
    %v95 = vadd.s32 %v90, %v94
    %v96 = vadd.s32 %v95, 536870912
    %v97 = vshrl.u32 %v96, 30
    %v98 = vshll.u32 %v97, 30
    %v99 = vsub.s32 %v95, %v98
    %vm100 = vcmp.lt.s32.totalorder %v99, 0
    %v101 = vsub.s32 0, %v99
    %v102 = vsel %vm100, %v101, %v99
    %v103 = vclz %v102
    %v104 = vsub.s32 %v103, 2
    %vm105 = vcmp.gt.s32.totalorder 0, %v104
    %v106 = vsel %vm105, 0, %v104
    %v107 = vsub.s32 32, %v106
    %v108 = vshll.u32 %v99, %v106
    %v109 = vshrl.u32 %v91, %v107
    %v110 = vor.u32 %v108, %v109
    %v111 = vsub.s32 4294967266, %v106
    %v112 = vadd.s32 %v111, 127
    %v113 = vshll.u32 %v112, 23
    %v114 = vor.u32 4788187, %v113
    %v115 = vand.u32 2147483647, %v114
    %v117 = vcvt.s32.f32 %v110
    %v118 = vmul.f32 %v117, %v115
    %v119 = vxor.u32 %v118, 2147483648
    %v120 = vsel %vm37, %v119, %v118
    %v121 = vsub.s32 4, %v97
    %v122 = vsel %vm37, %v121, %v97
    %v123 = vsel %vm36, %v34, %v120
    %v124 = vsel %vm36, 0, %v122
    %v125 = vcosq.f32.pop %v123
    %v126 = vsinq.f32.pop %v123
    %vm127 = vweird.f32 %v34
    %v128 = vadd.s32 %v124, 3
    %v129 = vand.u32 %v128, 3
    %vm130 = vcmp.lt.s32.totalorder %v129, 2
    %vm131 = vcmp.eq.s32.totalorder %v129, 0
    %v132 = vxor.u32 %v126, 2147483648
    %v133 = vsel %vm131, %v125, %v132
    %vm134 = vcmp.eq.s32.totalorder %v129, 2
    %v135 = vxor.u32 %v125, 2147483648
    %v136 = vsel %vm134, %v135, %v126
    %v137 = vsel %vm130, %v133, %v136
    %v138 = vsel %vm127, nan, %v137
    %139 = vst [vmem:[#allocation2] sm:$0xff] %v138
    %140 = vst [vmem:[#allocation2 + $0x8] sm:$0xff] %v138
    // Predicated region
    $region10: #{tpu_custom_call.1} parent=1 // pred_check
      _
    $region11: #{tpu_custom_call.1} parent=1 // pred_check_branch
      %142 = sbr.rel (0) target = $region13
    $region12: #{tpu_custom_call.1} parent=1 // pred_region
      %s144 = ssub.s32 256, 256
      %145 = vsyncadd [#allocation3], %s144
      %s147 = sshll.u32 [#allocation2], 4
      %s148 = int_to_ptr.vmem [resolvable:$true] %s147
      %150 = dma.vmem_to_hbm [thread:$0]  %s148, 256, %s2, [#allocation3]
    $region13: #{tpu_custom_call.1} parent=1 // pred_fallthru
      _
    // Predicated region
    $region14: #{tpu_custom_call.1} parent=1 // pred_check
      _
    $region15: #{tpu_custom_call.1} parent=1 // pred_check_branch
      %152 = sbr.rel (0) target = $region17
    $region16: #{tpu_custom_call.1} parent=1 // pred_region
      %153 = dma.done [#allocation3], 256
    $region17: #{tpu_custom_call.1} parent=1 // pred_fallthru
      _
    %154 = vsyncpa [#allocation3], 1

</llo_original>
